<compile_context>
chip_gen: v7x
topology: tpu7x:2x2x1
jax: 0.10.0
libtpu: 0.0.40
codegen_flags: <defaults>
</compile_context>

<pallas_src>
import functools

import jax
import jax.numpy as jnp
from jax.experimental import pallas as pl
from jax.experimental.pallas import tpu as pltpu

_LANE = 128  # lane width of a vreg
_SUB = 8     # sublane count of a vreg


def _round_up(n, m):
    return ((n + m - 1) // m) * m


# ---------------------------------------------------------------------------
# Kernel: fused 3-layer MLP on lane-padded, bias-folded operands.
#   x_ref : (TB, Din_p)   compute dtype (bf16 by default), column Din carries 1.0
#   w*_ref: padded weights with the bias folded in as an extra row and a 1.0
#           pass-through column, so biases ride the MXU f32 accumulator.
# ---------------------------------------------------------------------------
def _mlp_kernel(x_ref, w1_ref, w2_ref, w3_ref, o_ref):
    cd = x_ref.dtype
    # l1 (+ bias via the folded row) -> ReLU ; the constant-1 lane survives ReLU.
    h = jnp.dot(x_ref[...], w1_ref[...], preferred_element_type=jnp.float32)
    h = jnp.maximum(h, 0.0).astype(cd)
    # l2 (+ bias) -> ReLU
    h = jnp.dot(h, w2_ref[...], preferred_element_type=jnp.float32)
    h = jnp.maximum(h, 0.0).astype(cd)
    # l3 (+ bias), logits in f32
    o_ref[...] = jnp.dot(h, w3_ref[...],
                         preferred_element_type=jnp.float32).astype(o_ref.dtype)


def _jax_reference(x, params, compute_dtype=jnp.float32):
    """Pure-JAX forward.  With compute_dtype=bf16 it mirrors the kernel's
    quantization (bf16 MXU operands + bf16-stored biases, f32 accumulation)."""
    q = lambda a: a.astype(compute_dtype)
    qb = lambda b: b.astype(compute_dtype).astype(jnp.float32).reshape(1, -1)
    h = jnp.dot(q(x), q(params["w1"]), preferred_element_type=jnp.float32) + qb(params["b1"])
    h = jnp.maximum(h, 0.0)
    h = jnp.dot(q(h), q(params["w2"]), preferred_element_type=jnp.float32) + qb(params["b2"])
    h = jnp.maximum(h, 0.0)
    out = jnp.dot(q(h), q(params["w3"]), preferred_element_type=jnp.float32) + qb(params["b3"])
    return out


@functools.partial(jax.jit, static_argnames=("block_batch", "compute_dtype", "use_pallas"))
def neural_net_forward(x, params, *, block_batch=512,
                       compute_dtype=jnp.bfloat16, use_pallas=None):
    """Forward pass of NeuralNet.  x: (B, input_size) float32."""
    x = jnp.asarray(x, jnp.float32)
    B, Din = x.shape
    H = params["w1"].shape[1]
    C = params["w3"].shape[1]

    if use_pallas is None:
        # Toy config (train.py: B<=8, hidden=8) is launch/DMA-overhead bound in a
        # custom kernel; let XLA fuse it.  Pallas pays off at realistic batches.
        use_pallas = B * max(Din, H, C) >= 4096
    if not use_pallas:
        return _jax_reference(x, params, compute_dtype=jnp.float32)

    # ---- lane-pad + fold biases into the weights:  y = [x, 1] @ [W; b] --------
    Din_p = _round_up(Din + 1, _LANE)   # +1 lane carries the constant 1 (bias input)
    H_p = _round_up(H + 1, _LANE)       # +1 lane carries the constant 1 between layers
    C_p = _round_up(C, _LANE)

    TB = min(block_batch, _round_up(B, _SUB))   # batch tile (full sublanes)
    B_p = _round_up(B, TB)
    grid = (B_p // TB,)

    w1, b1 = params["w1"], params["b1"].reshape(-1)
    w2, b2 = params["w2"], params["b2"].reshape(-1)
    w3, b3 = params["w3"], params["b3"].reshape(-1)

    w1p = jnp.zeros((Din_p, H_p), jnp.float32).at[:Din, :H].set(w1)
    w1p = w1p.at[Din, :H].set(b1).at[Din, H].set(1.0)       # bias row + 1-lane pass-through
    w2p = jnp.zeros((H_p, H_p), jnp.float32).at[:H, :H].set(w2)
    w2p = w2p.at[H, :H].set(b2).at[H, H].set(1.0)
    w3p = jnp.zeros((H_p, C_p), jnp.float32).at[:H, :C].set(w3)
    w3p = w3p.at[H, :C].set(b3)

    xp = jnp.zeros((B_p, Din_p), jnp.float32).at[:B, :Din].set(x)
    xp = xp.at[:, Din].set(1.0)                              # the constant-1 bias lane

    # bf16 MXU operands (f32 accumulation happens inside the kernel).
    xp, w1p, w2p, w3p = (a.astype(compute_dtype) for a in (xp, w1p, w2p, w3p))

    # VMEM footprint (defaults, bf16): x tile 512*128*2B=128KiB (x2 buffers),
    # out tile 512*128*4B=256KiB (x2), weights 3*128*128*2B=96KiB resident —
    # well under even v7x's 32 MiB scoped budget.
    out_p = pl.pallas_call(
        _mlp_kernel,
        out_shape=jax.ShapeDtypeStruct((B_p, C_p), jnp.float32),
        grid_spec=pltpu.PrefetchScalarGridSpec(
            num_scalar_prefetch=0,
            grid=grid,
            in_specs=[
                pl.BlockSpec((TB, Din_p), lambda i: (i, 0)),     # x: tiled over batch
                pl.BlockSpec((Din_p, H_p), lambda i: (0, 0)),    # weights stay resident
                pl.BlockSpec((H_p, H_p), lambda i: (0, 0)),
                pl.BlockSpec((H_p, C_p), lambda i: (0, 0)),
            ],
            out_specs=pl.BlockSpec((TB, C_p), lambda i: (i, 0)),  # lane-dense output slab
        ),
        compiler_params=pltpu.CompilerParams(
            dimension_semantics=("parallel",),   # shard batch tiles across TCs (v7x)
        ),
    )(xp, w1p, w2p, w3p)

    return out_p[:B, :C]


def init_params(key, input_size, hidden_size, num_classes):
    """Deterministic parameter init (uniform, PyTorch-Linear-like bounds).
    Weights stored transposed vs. PyTorch: (in_features, out_features)."""
    ks = jax.random.split(key, 6)

    def linear(kw, kb, fan_in, fan_out):
        bound = 1.0 / jnp.sqrt(jnp.float32(fan_in))
        w = jax.random.uniform(kw, (fan_in, fan_out), jnp.float32, -bound, bound)
        b = jax.random.uniform(kb, (fan_out,), jnp.float32, -bound, bound)
        return w, b

    w1, b1 = linear(ks[0], ks[1], input_size, hidden_size)
    w2, b2 = linear(ks[2], ks[3], hidden_size, hidden_size)
    w3, b3 = linear(ks[4], ks[5], hidden_size, num_classes)
    return {"w1": w1, "b1": b1, "w2": w2, "b2": b2, "w3": w3, "b3": b3}


if __name__ == "__main__":
    key = jax.random.PRNGKey(0)
    kx, kp = jax.random.split(key)

    # Small shapes consistent with train.py (hidden_size=8, bag-of-words input,
    # a handful of intents).  batch=100 is deliberately not a multiple of the
    # tile (64) or of 8, exercising the padding + multi-step grid path.
    batch = 100
    input_size = 16
    hidden_size = 8
    num_classes = 4

    x = jax.random.normal(kx, (batch, input_size), jnp.float32)
    params = init_params(kp, input_size, hidden_size, num_classes)

    # Force the Pallas path (the default dispatch would route this toy size to
    # the fused pure-JAX path).  block_batch=64 -> grid of 2 batch tiles.
    out = neural_net_forward(x, params, block_batch=64, use_pallas=True)
    out = jax.block_until_ready(out)
    assert out.shape == (batch, num_classes)

    # Tight check vs. a reference that matches the kernel's bf16-operand /
    # f32-accumulation arithmetic.
    ref_bf16 = _jax_reference(x, params, compute_dtype=jnp.bfloat16)
    assert jnp.allclose(out, ref_bf16, atol=2e-3, rtol=2e-3), (
        float(jnp.max(jnp.abs(out - ref_bf16))))

    # Loose check vs. the pure-f32 PyTorch semantics (bf16 quantization noise only).
    ref_f32 = _jax_reference(x, params, compute_dtype=jnp.float32)
    assert jnp.allclose(out, ref_f32, atol=5e-2, rtol=5e-2), (
        float(jnp.max(jnp.abs(out - ref_f32))))

    print("KERNEL_OK")
</pallas_src>

<mosaic_0001>
module attributes {stable_mosaic.version = 11 : i64} {
  func.func @_mlp_kernel(%arg0: i32, %arg1: memref<64x128xbf16, #tpu.memory_space<vmem>>, %arg2: memref<128x128xbf16, #tpu.memory_space<vmem>>, %arg3: memref<128x128xbf16, #tpu.memory_space<vmem>>, %arg4: memref<128x128xbf16, #tpu.memory_space<vmem>>, %arg5: memref<64x128xf32, #tpu.memory_space<vmem>>) attributes {dimension_semantics = [#tpu.dimension_semantics<parallel>], iteration_bounds = array<i64: 2>, scalar_prefetch = 0 : i64, scratch_operands = 0 : i64, tpu.core_type = #tpu.core_type<tc>, window_params = [{transform_indices = @transform_0, window_bounds = array<i64: 64, 128>}, {pipeline_mode = #tpu.pipeline_mode<synchronous>, transform_indices = @transform_1, window_bounds = array<i64: 128, 128>}, {pipeline_mode = #tpu.pipeline_mode<synchronous>, transform_indices = @transform_2, window_bounds = array<i64: 128, 128>}, {pipeline_mode = #tpu.pipeline_mode<synchronous>, transform_indices = @transform_3, window_bounds = array<i64: 128, 128>}, {transform_indices = @transform_4, window_bounds = array<i64: 64, 128>}]} {
    %c0 = arith.constant 0 : index
    %c0_0 = arith.constant 0 : index
    %0 = vector.load %arg1[%c0, %c0_0] : memref<64x128xbf16, #tpu.memory_space<vmem>>, vector<64x128xbf16>
    %c0_1 = arith.constant 0 : index
    %c0_2 = arith.constant 0 : index
    %1 = vector.load %arg2[%c0_1, %c0_2] : memref<128x128xbf16, #tpu.memory_space<vmem>>, vector<128x128xbf16>
    %cst = arith.constant dense<0.000000e+00> : vector<64x128xf32>
    %2 = tpu.matmul %0, %1, %cst {dimension_numbers = #tpu.dot_dimension_numbers<[1], [0], [0], [1], [0, 0, 1, 1], [], []>} : vector<64x128xbf16>, vector<128x128xbf16>, vector<64x128xf32> -> vector<64x128xf32>
    %cst_3 = arith.constant 0.000000e+00 : f32
    %3 = vector.broadcast %cst_3 : f32 to vector<64x128xf32>
    %4 = arith.maximumf %2, %3 : vector<64x128xf32>
    %5 = arith.truncf %4 : vector<64x128xf32> to vector<64x128xbf16>
    %c0_4 = arith.constant 0 : index
    %c0_5 = arith.constant 0 : index
    %6 = vector.load %arg3[%c0_4, %c0_5] : memref<128x128xbf16, #tpu.memory_space<vmem>>, vector<128x128xbf16>
    %cst_6 = arith.constant dense<0.000000e+00> : vector<64x128xf32>
    %7 = tpu.matmul %5, %6, %cst_6 {dimension_numbers = #tpu.dot_dimension_numbers<[1], [0], [0], [1], [0, 0, 1, 1], [], []>} : vector<64x128xbf16>, vector<128x128xbf16>, vector<64x128xf32> -> vector<64x128xf32>
    %cst_7 = arith.constant 0.000000e+00 : f32
    %8 = vector.broadcast %cst_7 : f32 to vector<64x128xf32>
    %9 = arith.maximumf %7, %8 : vector<64x128xf32>
    %10 = arith.truncf %9 : vector<64x128xf32> to vector<64x128xbf16>
    %c0_8 = arith.constant 0 : index
    %c0_9 = arith.constant 0 : index
    %11 = vector.load %arg4[%c0_8, %c0_9] : memref<128x128xbf16, #tpu.memory_space<vmem>>, vector<128x128xbf16>
    %cst_10 = arith.constant dense<0.000000e+00> : vector<64x128xf32>
    %12 = tpu.matmul %10, %11, %cst_10 {dimension_numbers = #tpu.dot_dimension_numbers<[1], [0], [0], [1], [0, 0, 1, 1], [], []>} : vector<64x128xbf16>, vector<128x128xbf16>, vector<64x128xf32> -> vector<64x128xf32>
    %c0_11 = arith.constant 0 : index
    %c0_12 = arith.constant 0 : index
    %13 = vector.load %arg5[%c0_11, %c0_12] : memref<64x128xf32, #tpu.memory_space<vmem>>, vector<64x128xf32>
    tpu.vector_store %arg5[%c0_11, %c0_12], %12 {strides = array<i32>} : memref<64x128xf32, #tpu.memory_space<vmem>>, vector<64x128xf32>,
    return
  }
  func.func @transform_0(%arg0: i32) -> (i32, i32) {
    %c0_i32 = arith.constant 0 : i32
    %c0_i32_0 = arith.constant 0 : i32
    return %arg0, %c0_i32 : i32, i32
  }
  func.func @transform_1(%arg0: i32) -> (i32, i32) {
    %c0_i32 = arith.constant 0 : i32
    %c0_i32_0 = arith.constant 0 : i32
    %c0_i32_1 = arith.constant 0 : i32
    return %c0_i32, %c0_i32_0 : i32, i32
  }
  func.func @transform_2(%arg0: i32) -> (i32, i32) {
    %c0_i32 = arith.constant 0 : i32
    %c0_i32_0 = arith.constant 0 : i32
    %c0_i32_1 = arith.constant 0 : i32
    return %c0_i32, %c0_i32_0 : i32, i32
  }
  func.func @transform_3(%arg0: i32) -> (i32, i32) {
    %c0_i32 = arith.constant 0 : i32
    %c0_i32_0 = arith.constant 0 : i32
    %c0_i32_1 = arith.constant 0 : i32
    return %c0_i32, %c0_i32_0 : i32, i32
  }
  func.func @transform_4(%arg0: i32) -> (i32, i32) {
    %c0_i32 = arith.constant 0 : i32
    %c0_i32_0 = arith.constant 0 : i32
    return %arg0, %c0_i32 : i32, i32
  }
}

</mosaic_0001>

<llo_original>
// kernel: neural_net_forward.1
$region0: #{neural_net_forward.1}
  #allocation0 [shape = 'u32[]', space=smem, size = 0x4, offset = 0x4, fixed_abs, tag = 'smem constant byte address 0x4 - core index']
  #allocation1 [shape = 'u32[144,128]{1,0:T(1,128)}', space=vmem, size = 0x12000, scoped, tag = 'internal scratch']
  %s0 = inlined_call_operand.vmem [shape: bf16[128,128], index: 0, kind: input, shape index: {}]
  %s1 = inlined_call_operand.vmem [shape: bf16[128,128], index: 1, kind: input, shape index: {}]
  %s2 = inlined_call_operand.vmem [shape: bf16[128,128], index: 2, kind: input, shape index: {}]
  %s3 = inlined_call_operand.vmem [shape: bf16[128,128], index: 3, kind: input, shape index: {}]
  %s4 = inlined_call_operand.vmem [shape: f32[128,128], index: 4, kind: output, shape index: {}]
  %s5 = sld [smem:[#allocation0]]
  $region49: #{neural_net_forward.1} parent=0
    _
  %s7 = ssub.s32 1, %s5
  %s8 = scalar_select 0, %s7, %s5
  loop: start=0, step=1, limit=4
  $region2: #{neural_net_forward.1} parent=0 // loop_pre_header
    _
  $region3: #{neural_net_forward.1} parent=0 // loop_header
    %s10 = sphi 0, %s14
    %p11 = scmp.ge.s32.totalorder %s10, 4
    %s20 = sphi 0, %s22
    %s23 = sphi 0, %s20
    %s24 = sphi 0, %s23
    %s40 = sphi 0, %s24
    %s44 = sphi 0, %s44
    %s46 = sphi 0, %s44
    %s47 = sphi 0, %s46
    %s61 = sphi 0, %s47
    %s65 = sphi 0, %s65
    %s67 = sphi 0, %s65
    %s68 = sphi 0, %s67
    %s82 = sphi 0, %s68
    %s86 = sphi 0, %s86
    %s88 = sphi 0, %s86
    %s89 = sphi 0, %s88
    %s103 = sphi 0, %s89
    %s109 = sphi 0, %s111
    %s112 = sphi 0, %s109
    %s113 = sphi 0, %s112
    %s129 = sphi 0, %s113
  $region4: #{neural_net_forward.1} parent=0 // loop_header_branch
    %13 = sbr.rel (%p11) target = $region8
  $region5: #{neural_net_forward.1} parent=0 // loop_body
    %s15 = ssub.s32 %s10, 1
    %s16 = ssub.s32 %s10, 2
    %s17 = sadd.s32 %s10, 1
    %s18 = ssub.s32 %s10, %s17
    %p19 = scmp.eq.s32.totalorder %s18, 0
    %s21 = sadd.s32 %s20, 1
    %s22 = scalar_select %p19, %s20, %s21
    %p25 = pneg %p19
    %p26 = scmp.eq.s32.totalorder %s10, 1
    %p27 = por %p25, %p26
    %p28 = scmp.ne.s32.totalorder %s20, %s23
    %p29 = scmp.eq.s32.totalorder %s10, 0
    %p30 = por %p28, %p29
    %p31 = scmp.ne.s32.totalorder %s20, %s23
    %p32 = scmp.eq.s32.totalorder %s15, 1
    %p33 = por %p31, %p32
    %p34 = scmp.ne.s32.totalorder %s23, %s24
    %p35 = scmp.eq.s32.totalorder %s15, 0
    %p36 = por %p34, %p35
    %p37 = scmp.ne.s32.totalorder %s23, %s24
    %p38 = scmp.eq.s32.totalorder %s16, 1
    %p39 = por %p37, %p38
    %p41 = scmp.ne.s32.totalorder %s24, %s40
    %p42 = scmp.eq.s32.totalorder %s16, 0
    %p43 = por %p41, %p42
    %s45 = sadd.s32 %s44, 1
    %p48 = scmp.eq.s32.totalorder %s10, 1
    %p49 = scmp.ne.s32.totalorder %s44, %s46
    %p50 = scmp.eq.s32.totalorder %s10, 0
    %p51 = por %p49, %p50
    %p52 = scmp.ne.s32.totalorder %s44, %s46
    %p53 = scmp.eq.s32.totalorder %s15, 1
    %p54 = por %p52, %p53
    %p55 = scmp.ne.s32.totalorder %s46, %s47
    %p56 = scmp.eq.s32.totalorder %s15, 0
    %p57 = por %p55, %p56
    %p58 = scmp.ne.s32.totalorder %s46, %s47
    %p59 = scmp.eq.s32.totalorder %s16, 1
    %p60 = por %p58, %p59
    %p62 = scmp.ne.s32.totalorder %s47, %s61
    %p63 = scmp.eq.s32.totalorder %s16, 0
    %p64 = por %p62, %p63
    %s66 = sadd.s32 %s65, 1
    %p69 = scmp.eq.s32.totalorder %s10, 1
    %p70 = scmp.ne.s32.totalorder %s65, %s67
    %p71 = scmp.eq.s32.totalorder %s10, 0
    %p72 = por %p70, %p71
    %p73 = scmp.ne.s32.totalorder %s65, %s67
    %p74 = scmp.eq.s32.totalorder %s15, 1
    %p75 = por %p73, %p74
    %p76 = scmp.ne.s32.totalorder %s67, %s68
    %p77 = scmp.eq.s32.totalorder %s15, 0
    %p78 = por %p76, %p77
    %p79 = scmp.ne.s32.totalorder %s67, %s68
    %p80 = scmp.eq.s32.totalorder %s16, 1
    %p81 = por %p79, %p80
    %p83 = scmp.ne.s32.totalorder %s68, %s82
    %p84 = scmp.eq.s32.totalorder %s16, 0
    %p85 = por %p83, %p84
    %s87 = sadd.s32 %s86, 1
    %p90 = scmp.eq.s32.totalorder %s10, 1
    %p91 = scmp.ne.s32.totalorder %s86, %s88
    %p92 = scmp.eq.s32.totalorder %s10, 0
    %p93 = por %p91, %p92
    %p94 = scmp.ne.s32.totalorder %s86, %s88
    %p95 = scmp.eq.s32.totalorder %s15, 1
    %p96 = por %p94, %p95
    %p97 = scmp.ne.s32.totalorder %s88, %s89
    %p98 = scmp.eq.s32.totalorder %s15, 0
    %p99 = por %p97, %p98
    %p100 = scmp.ne.s32.totalorder %s88, %s89
    %p101 = scmp.eq.s32.totalorder %s16, 1
    %p102 = por %p100, %p101
    %p104 = scmp.ne.s32.totalorder %s89, %s103
    %p105 = scmp.eq.s32.totalorder %s16, 0
    %p106 = por %p104, %p105
    %s107 = ssub.s32 %s10, %s17
    %p108 = scmp.eq.s32.totalorder %s107, 0
    %s110 = sadd.s32 %s109, 1
    %s111 = scalar_select %p108, %s109, %s110
    %p114 = pneg %p108
    %p115 = scmp.eq.s32.totalorder %s10, 1
    %p116 = por %p114, %p115
    %p117 = scmp.ne.s32.totalorder %s109, %s112
    %p118 = scmp.eq.s32.totalorder %s10, 0
    %p119 = por %p117, %p118
    %p120 = scmp.ne.s32.totalorder %s109, %s112
    %p121 = scmp.eq.s32.totalorder %s15, 1
    %p122 = por %p120, %p121
    %p123 = scmp.ne.s32.totalorder %s112, %s113
    %p124 = scmp.eq.s32.totalorder %s15, 0
    %p125 = por %p123, %p124
    %p126 = scmp.ne.s32.totalorder %s112, %s113
    %p127 = scmp.eq.s32.totalorder %s16, 1
    %p128 = por %p126, %p127
    %p130 = scmp.ne.s32.totalorder %s113, %s129
    %p131 = scmp.eq.s32.totalorder %s16, 0
    %p132 = por %p130, %p131
    %p133 = scmp.le.s32.totalorder 1, %s10
    %p134 = scmp.lt.s32.totalorder %s10, 3
    %p135 = pnand %p133, %p134
    %p136 = pneg %p135
    // Predicated region
    $region9: #{neural_net_forward.1} parent=5 // pred_check
      _
    $region10: #{neural_net_forward.1} parent=5 // pred_check_branch
      %138 = sbr.rel (%p135) target = $region12
    $region11: #{neural_net_forward.1} parent=5 // pred_region
      %s139 = ssub.s32 %s10, 1
      // Predicated region
      $region13: #{neural_net_forward.1} parent=11 // pred_check
        %p140 = pneg %p57
      $region14: #{neural_net_forward.1} parent=11 // pred_check_branch
        %142 = sbr.rel (%p140) target = $region16
      $region15: #{neural_net_forward.1} parent=11 // pred_region
        _
      $region16: #{neural_net_forward.1} parent=11 // pred_fallthru
        _
      // Predicated region
      $region17: #{neural_net_forward.1} parent=11 // pred_check
        %p143 = pneg %p78
      $region18: #{neural_net_forward.1} parent=11 // pred_check_branch
        %145 = sbr.rel (%p143) target = $region20
      $region19: #{neural_net_forward.1} parent=11 // pred_region
        _
      $region20: #{neural_net_forward.1} parent=11 // pred_fallthru
        _
      // Predicated region
      $region21: #{neural_net_forward.1} parent=11 // pred_check
        %p146 = pneg %p99
      $region22: #{neural_net_forward.1} parent=11 // pred_check_branch
        %148 = sbr.rel (%p146) target = $region24
      $region23: #{neural_net_forward.1} parent=11 // pred_region
        _
      $region24: #{neural_net_forward.1} parent=11 // pred_fallthru
        _
    $region12: #{neural_net_forward.1} parent=5 // pred_fallthru
      _
    %p149 = scmp.lt.s32.totalorder %s10, 2
    // Predicated region
    $region25: #{neural_net_forward.1} parent=5 // pred_check
      %p150 = pneg %p149
    $region26: #{neural_net_forward.1} parent=5 // pred_check_branch
      %152 = sbr.rel (%p150) target = $region28
    $region27: #{neural_net_forward.1} parent=5 // pred_region
      // Predicated region
      $region29: #{neural_net_forward.1} parent=27 // pred_check
        %p153 = pneg %p30
      $region30: #{neural_net_forward.1} parent=27 // pred_check_branch
        %155 = sbr.rel (%p153) target = $region32
      $region31: #{neural_net_forward.1} parent=27 // pred_region
        %s156 = smul.u32 8, %s10
        %p157 = scmp.lt.s32.totalorder %s156, 15
        %s158 = scalar_select %p157, %s156, 15
        %s159 = smul.addr %s158, 4
        %s160 = scalar_lea.vmem %s0, %s159
        %s161 = smul.u32 8, %s10
      $region32: #{neural_net_forward.1} parent=27 // pred_fallthru
        _
    $region28: #{neural_net_forward.1} parent=5 // pred_fallthru
      _
    %p162 = scmp.le.s32.totalorder 1, %s10
    %p163 = scmp.lt.s32.totalorder %s10, 3
    %p164 = pnand %p162, %p163
    %p165 = pneg %p164
    // Predicated region
    $region33: #{neural_net_forward.1} parent=5 // pred_check
      _
    $region34: #{neural_net_forward.1} parent=5 // pred_check_branch
      %167 = sbr.rel (%p164) target = $region36
    $region35: #{neural_net_forward.1} parent=5 // pred_region
      %s168 = ssub.s32 %s10, 1
      %s169 = smul.u32 8, %s15
      %p170 = scmp.lt.s32.totalorder %s169, 15
      %s171 = scalar_select %p170, %s169, 15
      %s172 = smul.addr %s171, 4
      %s173 = scalar_lea.vmem %s0, %s172
      %p174 = pneg %p36
      %p175 = pneg %p33
      %p176 = pneg %p57
      %p177 = pneg %p54
      %p178 = pneg %p78
      %p179 = pneg %p75
      %p180 = pneg %p99
      %p181 = pneg %p96
      %p182 = pneg %p125
      %p183 = pneg %p122
      %s184 = smul.u32 8, %s15
      %p185 = scmp.lt.s32.totalorder %s184, 15
      %s186 = scalar_select %p185, %s184, 15
      %s187 = smul.addr %s186, 8
      %s188 = scalar_lea.vmem %s4, %s187
      %s189 = smul.u32 8, %s15
      %p190 = scmp.lt.s32.totalorder %s189, 15
      %s191 = scalar_select %p190, %s189, 15
      %s192 = smul.addr %s191, 4
      %s193 = scalar_lea.vmem %s0, %s192
      %s194 = smul.u32 8, %s15
      %s195 = smul.u32 8, %s15
      %p196 = scmp.lt.s32.totalorder %s195, 15
      %s197 = scalar_select %p196, %s195, 15
      %s198 = smul.addr %s197, 8
      %s199 = scalar_lea.vmem %s4, %s198
      %s200 = smul.u32 8, %s15
      %v202 = vld [vmem:[%s193] sm:$0xf]
      %v203 = vld [vmem:[%s193 + $0x4] sm:$0xf]
      %v204 = vld [vmem:[%s193 + $0x8] sm:$0xf]
      %v205 = vld [vmem:[%s193 + $0xc] sm:$0xf]
      %v206 = vld [vmem:[%s193 + $0x10] sm:$0xf]
      %v207 = vld [vmem:[%s193 + $0x14] sm:$0xf]
      %v208 = vld [vmem:[%s193 + $0x18] sm:$0xf]
      %v209 = vld [vmem:[%s193 + $0x1c] sm:$0xf]
      %v210 = vld [vmem:[%s1] sm:$0xf]
      %v211 = vld [vmem:[%s1 + $0x4] sm:$0xf]
      %v212 = vld [vmem:[%s1 + $0x8] sm:$0xf]
      %v213 = vld [vmem:[%s1 + $0xc] sm:$0xf]
      %v214 = vld [vmem:[%s1 + $0x10] sm:$0xf]
      %v215 = vld [vmem:[%s1 + $0x14] sm:$0xf]
      %v216 = vld [vmem:[%s1 + $0x18] sm:$0xf]
      %v217 = vld [vmem:[%s1 + $0x1c] sm:$0xf]
      %v218 = vld [vmem:[%s1 + $0x20] sm:$0xf]
      %v219 = vld [vmem:[%s1 + $0x24] sm:$0xf]
      %v220 = vld [vmem:[%s1 + $0x28] sm:$0xf]
      %v221 = vld [vmem:[%s1 + $0x2c] sm:$0xf]
      %v222 = vld [vmem:[%s1 + $0x30] sm:$0xf]
      %v223 = vld [vmem:[%s1 + $0x34] sm:$0xf]
      %v224 = vld [vmem:[%s1 + $0x38] sm:$0xf]
      %v225 = vld [vmem:[%s1 + $0x3c] sm:$0xf]
      %v234 = vunpack.c.l.b16 %v202
      %v235 = vunpack.c.l.b16 %v203
      %v236 = vunpack.c.l.b16 %v204
      %v237 = vunpack.c.l.b16 %v205
      %v238 = vunpack.c.l.b16 %v206
      %v239 = vunpack.c.l.b16 %v207
      %v240 = vunpack.c.l.b16 %v208
      %v241 = vunpack.c.l.b16 %v209
      %v242 = vpack.c.b16 %v235, %v234
      %v243 = vpack.c.b16 %v237, %v236
      %v244 = vpack.c.b16 %v239, %v238
      %v245 = vpack.c.b16 %v241, %v240
      %v266 = vunpack.c.l.b16 %v210
      %v267 = vunpack.c.l.b16 %v211
      %v268 = vunpack.c.l.b16 %v212
      %v269 = vunpack.c.l.b16 %v213
      %v270 = vunpack.c.l.b16 %v214
      %v271 = vunpack.c.l.b16 %v215
      %v272 = vunpack.c.l.b16 %v216
      %v273 = vunpack.c.l.b16 %v217
      %v274 = vunpack.c.l.b16 %v218
      %v275 = vunpack.c.l.b16 %v219
      %v276 = vunpack.c.l.b16 %v220
      %v277 = vunpack.c.l.b16 %v221
      %v278 = vunpack.c.l.b16 %v222
      %v279 = vunpack.c.l.b16 %v223
      %v280 = vunpack.c.l.b16 %v224
      %v281 = vunpack.c.l.b16 %v225
      %v282 = vpack.c.b16 %v267, %v266
      %v283 = vpack.c.b16 %v269, %v268
      %v284 = vpack.c.b16 %v271, %v270
      %v285 = vpack.c.b16 %v273, %v272
      %v286 = vpack.c.b16 %v275, %v274
      %v287 = vpack.c.b16 %v277, %v276
      %v288 = vpack.c.b16 %v279, %v278
      %v289 = vpack.c.b16 %v281, %v280
      %298 = vmatprep.subr.bf16.mxu0 0
      %299 = vmatpush1.bf16.msra.mxu0 %v282
      %300 = vmatprep.subr.bf16.mxu0 0
      %301 = vmatpush1.bf16.msra.mxu0 %v283
      %302 = vmatprep.subr.bf16.mxu0 0
      %303 = vmatpush1.bf16.msra.mxu0 %v284
      %304 = vmatprep.subr.bf16.mxu0 0
      %305 = vmatpush1.bf16.msra.mxu0 %v285
      %306 = vmatprep.subr.bf16.mxu0 0
      %307 = vmatpush1.bf16.msra.mxu0 %v286
      %308 = vmatprep.subr.bf16.mxu0 0
      %309 = vmatpush1.bf16.msra.mxu0 %v287
      %310 = vmatprep.subr.bf16.mxu0 0
      %311 = vmatpush1.bf16.msra.mxu0 %v288
      %312 = vmatprep.subr.bf16.mxu0 0
      %313 = vmatpush1.bf16.msra.mxu0 %v289
      %314 = vmatprep.subr.bf16.mxu0 0
      %315 = vmatpush1.bf16.msra.mxu0 0
      %316 = vmatprep.subr.bf16.mxu0 0
      %317 = vmatpush1.bf16.msra.mxu0 0
      %318 = vmatprep.subr.bf16.mxu0 0
      %319 = vmatpush1.bf16.msra.mxu0 0
      %320 = vmatprep.subr.bf16.mxu0 0
      %321 = vmatpush1.bf16.msra.mxu0 0
      %322 = vmatprep.subr.bf16.mxu0 0
      %323 = vmatpush1.bf16.msra.mxu0 0
      %324 = vmatprep.subr.bf16.mxu0 0
      %325 = vmatpush1.bf16.msra.mxu0 0
      %326 = vmatprep.subr.bf16.mxu0 0
      %327 = vmatpush1.bf16.msra.mxu0 0
      %328 = vmatprep.subr.bf16.mxu0 0
      %329 = vmatpush1.bf16.msra.mxu0 0
      %330 = vmatprep.mubr.bf16.mxu0 0
      %331 = vmatmul.mubr.bf16.gmra.mrb[0].mxu0 %v242
      %v332 = vpop.f32.mrb[0].mxu0
      %v333 = vadd.f32 0.0, %v332
      %v334 = vpop.f32.mrb[0].mxu0
      %v335 = vpop.f32.mrb[0].mxu0
      %v336 = vadd.f32 0.0, %v335
      %v337 = vpop.f32.mrb[0].mxu0
      %338 = vmatprep.mubr.bf16.mxu0 0
      %339 = vmatmul.mubr.bf16.gmra.mrb[0].mxu0 %v243
      %v340 = vpop.f32.mrb[0].mxu0
      %v341 = vadd.f32 0.0, %v340
      %v342 = vpop.f32.mrb[0].mxu0
      %v343 = vpop.f32.mrb[0].mxu0
      %v344 = vadd.f32 0.0, %v343
      %v345 = vpop.f32.mrb[0].mxu0
      %346 = vmatprep.mubr.bf16.mxu0 0
      %347 = vmatmul.mubr.bf16.gmra.mrb[0].mxu0 %v244
      %v348 = vpop.f32.mrb[0].mxu0
      %v349 = vadd.f32 0.0, %v348
      %v350 = vpop.f32.mrb[0].mxu0
      %v351 = vpop.f32.mrb[0].mxu0
      %v352 = vadd.f32 0.0, %v351
      %v353 = vpop.f32.mrb[0].mxu0
      %354 = vmatprep.mubr.bf16.mxu0 0
      %355 = vmatmul.mubr.bf16.gmra.mrb[0].mxu0 %v245
      %v356 = vpop.f32.mrb[0].mxu0
      %v357 = vadd.f32 0.0, %v356
      %v358 = vpop.f32.mrb[0].mxu0
      %v359 = vpop.f32.mrb[0].mxu0
      %v360 = vadd.f32 0.0, %v359
      %v361 = vpop.f32.mrb[0].mxu0
      %362 = vdwg.mxu0
      %v363 = vmax.f32 %v333, 0.0
      %v364 = vmax.f32 %v336, 0.0
      %v365 = vmax.f32 %v341, 0.0
      %v366 = vmax.f32 %v344, 0.0
      %v367 = vmax.f32 %v349, 0.0
      %v368 = vmax.f32 %v352, 0.0
      %v369 = vmax.f32 %v357, 0.0
      %v370 = vmax.f32 %v360, 0.0
      %v371 = vpack.c.bf16 %v364, %v363
      %v372 = vpack.c.bf16 %v366, %v365
      %v373 = vpack.c.bf16 %v368, %v367
      %v374 = vpack.c.bf16 %v370, %v369
      %v375 = vld [vmem:[%s2] sm:$0xf]
      %v376 = vld [vmem:[%s2 + $0x4] sm:$0xf]
      %v377 = vld [vmem:[%s2 + $0x8] sm:$0xf]
      %v378 = vld [vmem:[%s2 + $0xc] sm:$0xf]
      %v379 = vld [vmem:[%s2 + $0x10] sm:$0xf]
      %v380 = vld [vmem:[%s2 + $0x14] sm:$0xf]
      %v381 = vld [vmem:[%s2 + $0x18] sm:$0xf]
      %v382 = vld [vmem:[%s2 + $0x1c] sm:$0xf]
      %v383 = vld [vmem:[%s2 + $0x20] sm:$0xf]
      %v384 = vld [vmem:[%s2 + $0x24] sm:$0xf]
      %v385 = vld [vmem:[%s2 + $0x28] sm:$0xf]
      %v386 = vld [vmem:[%s2 + $0x2c] sm:$0xf]
      %v387 = vld [vmem:[%s2 + $0x30] sm:$0xf]
      %v388 = vld [vmem:[%s2 + $0x34] sm:$0xf]
      %v389 = vld [vmem:[%s2 + $0x38] sm:$0xf]
      %v390 = vld [vmem:[%s2 + $0x3c] sm:$0xf]
      %v407 = vunpack.c.l.b16 %v375
      %v408 = vunpack.c.l.b16 %v376
      %v409 = vunpack.c.l.b16 %v377
      %v410 = vunpack.c.l.b16 %v378
      %v411 = vunpack.c.l.b16 %v379
      %v412 = vunpack.c.l.b16 %v380
      %v413 = vunpack.c.l.b16 %v381
      %v414 = vunpack.c.l.b16 %v382
      %v415 = vunpack.c.l.b16 %v383
      %v416 = vunpack.c.l.b16 %v384
      %v417 = vunpack.c.l.b16 %v385
      %v418 = vunpack.c.l.b16 %v386
      %v419 = vunpack.c.l.b16 %v387
      %v420 = vunpack.c.l.b16 %v388
      %v421 = vunpack.c.l.b16 %v389
      %v422 = vunpack.c.l.b16 %v390
      %v423 = vpack.c.b16 %v408, %v407
      %v424 = vpack.c.b16 %v410, %v409
      %v425 = vpack.c.b16 %v412, %v411
      %v426 = vpack.c.b16 %v414, %v413
      %v427 = vpack.c.b16 %v416, %v415
      %v428 = vpack.c.b16 %v418, %v417
      %v429 = vpack.c.b16 %v420, %v419
      %v430 = vpack.c.b16 %v422, %v421
      %439 = vmatprep.subr.bf16.mxu0 0
      %440 = vmatpush1.bf16.msra.mxu0 %v423
      %441 = vmatprep.subr.bf16.mxu0 0
      %442 = vmatpush1.bf16.msra.mxu0 %v424
      %443 = vmatprep.subr.bf16.mxu0 0
      %444 = vmatpush1.bf16.msra.mxu0 %v425
      %445 = vmatprep.subr.bf16.mxu0 0
      %446 = vmatpush1.bf16.msra.mxu0 %v426
      %447 = vmatprep.subr.bf16.mxu0 0
      %448 = vmatpush1.bf16.msra.mxu0 %v427
      %449 = vmatprep.subr.bf16.mxu0 0
      %450 = vmatpush1.bf16.msra.mxu0 %v428
      %451 = vmatprep.subr.bf16.mxu0 0
      %452 = vmatpush1.bf16.msra.mxu0 %v429
      %453 = vmatprep.subr.bf16.mxu0 0
      %454 = vmatpush1.bf16.msra.mxu0 %v430
      %455 = vmatprep.subr.bf16.mxu0 0
      %456 = vmatpush1.bf16.msra.mxu0 0
      %457 = vmatprep.subr.bf16.mxu0 0
      %458 = vmatpush1.bf16.msra.mxu0 0
      %459 = vmatprep.subr.bf16.mxu0 0
      %460 = vmatpush1.bf16.msra.mxu0 0
      %461 = vmatprep.subr.bf16.mxu0 0
      %462 = vmatpush1.bf16.msra.mxu0 0
      %463 = vmatprep.subr.bf16.mxu0 0
      %464 = vmatpush1.bf16.msra.mxu0 0
      %465 = vmatprep.subr.bf16.mxu0 0
      %466 = vmatpush1.bf16.msra.mxu0 0
      %467 = vmatprep.subr.bf16.mxu0 0
      %468 = vmatpush1.bf16.msra.mxu0 0
      %469 = vmatprep.subr.bf16.mxu0 0
      %470 = vmatpush1.bf16.msra.mxu0 0
      %471 = vmatprep.mubr.bf16.mxu0 0
      %472 = vmatmul.mubr.bf16.gmra.mrb[0].mxu0 %v371
      %v473 = vpop.f32.mrb[0].mxu0
      %v474 = vadd.f32 0.0, %v473
      %v475 = vpop.f32.mrb[0].mxu0
      %v476 = vpop.f32.mrb[0].mxu0
      %v477 = vadd.f32 0.0, %v476
      %v478 = vpop.f32.mrb[0].mxu0
      %479 = vmatprep.mubr.bf16.mxu0 0
      %480 = vmatmul.mubr.bf16.gmra.mrb[0].mxu0 %v372
      %v481 = vpop.f32.mrb[0].mxu0
      %v482 = vadd.f32 0.0, %v481
      %v483 = vpop.f32.mrb[0].mxu0
      %v484 = vpop.f32.mrb[0].mxu0
      %v485 = vadd.f32 0.0, %v484
      %v486 = vpop.f32.mrb[0].mxu0
      %487 = vmatprep.mubr.bf16.mxu0 0
      %488 = vmatmul.mubr.bf16.gmra.mrb[0].mxu0 %v373
      %v489 = vpop.f32.mrb[0].mxu0
      %v490 = vadd.f32 0.0, %v489
      %v491 = vpop.f32.mrb[0].mxu0
      %v492 = vpop.f32.mrb[0].mxu0
      %v493 = vadd.f32 0.0, %v492
      %v494 = vpop.f32.mrb[0].mxu0
      %495 = vmatprep.mubr.bf16.mxu0 0
      %496 = vmatmul.mubr.bf16.gmra.mrb[0].mxu0 %v374
      %v497 = vpop.f32.mrb[0].mxu0
      %v498 = vadd.f32 0.0, %v497
      %v499 = vpop.f32.mrb[0].mxu0
      %v500 = vpop.f32.mrb[0].mxu0
      %v501 = vadd.f32 0.0, %v500
      %v502 = vpop.f32.mrb[0].mxu0
      %503 = vdwg.mxu0
      %v504 = vmax.f32 %v474, 0.0
      %v505 = vmax.f32 %v477, 0.0
      %v506 = vmax.f32 %v482, 0.0
      %v507 = vmax.f32 %v485, 0.0
      %v508 = vmax.f32 %v490, 0.0
      %v509 = vmax.f32 %v493, 0.0
      %v510 = vmax.f32 %v498, 0.0
      %v511 = vmax.f32 %v501, 0.0
      %v512 = vpack.c.bf16 %v505, %v504
      %v513 = vpack.c.bf16 %v507, %v506
      %v514 = vpack.c.bf16 %v509, %v508
      %v515 = vpack.c.bf16 %v511, %v510
      %v516 = vld [vmem:[%s3] sm:$0xf]
      %v517 = vld [vmem:[%s3 + $0x4] sm:$0xf]
      %v518 = vld [vmem:[%s3 + $0x8] sm:$0xf]
      %v519 = vld [vmem:[%s3 + $0xc] sm:$0xf]
      %v520 = vld [vmem:[%s3 + $0x10] sm:$0xf]
      %v521 = vld [vmem:[%s3 + $0x14] sm:$0xf]
      %v522 = vld [vmem:[%s3 + $0x18] sm:$0xf]
      %v523 = vld [vmem:[%s3 + $0x1c] sm:$0xf]
      %v524 = vld [vmem:[%s3 + $0x20] sm:$0xf]
      %v525 = vld [vmem:[%s3 + $0x24] sm:$0xf]
      %v526 = vld [vmem:[%s3 + $0x28] sm:$0xf]
      %v527 = vld [vmem:[%s3 + $0x2c] sm:$0xf]
      %v528 = vld [vmem:[%s3 + $0x30] sm:$0xf]
      %v529 = vld [vmem:[%s3 + $0x34] sm:$0xf]
      %v530 = vld [vmem:[%s3 + $0x38] sm:$0xf]
      %v531 = vld [vmem:[%s3 + $0x3c] sm:$0xf]
      %v548 = vunpack.c.l.b16 %v516
      %v549 = vunpack.c.l.b16 %v517
      %v550 = vunpack.c.l.b16 %v518
      %v551 = vunpack.c.l.b16 %v519
      %v552 = vunpack.c.l.b16 %v520
      %v553 = vunpack.c.l.b16 %v521
      %v554 = vunpack.c.l.b16 %v522
      %v555 = vunpack.c.l.b16 %v523
      %v556 = vunpack.c.l.b16 %v524
      %v557 = vunpack.c.l.b16 %v525
      %v558 = vunpack.c.l.b16 %v526
      %v559 = vunpack.c.l.b16 %v527
      %v560 = vunpack.c.l.b16 %v528
      %v561 = vunpack.c.l.b16 %v529
      %v562 = vunpack.c.l.b16 %v530
      %v563 = vunpack.c.l.b16 %v531
      %v564 = vpack.c.b16 %v549, %v548
      %v565 = vpack.c.b16 %v551, %v550
      %v566 = vpack.c.b16 %v553, %v552
      %v567 = vpack.c.b16 %v555, %v554
      %v568 = vpack.c.b16 %v557, %v556
      %v569 = vpack.c.b16 %v559, %v558
      %v570 = vpack.c.b16 %v561, %v560
      %v571 = vpack.c.b16 %v563, %v562
      %580 = vmatprep.subr.bf16.mxu0 0
      %581 = vmatpush1.bf16.msra.mxu0 %v564
      %582 = vmatprep.subr.bf16.mxu0 0
      %583 = vmatpush1.bf16.msra.mxu0 %v565
      %584 = vmatprep.subr.bf16.mxu0 0
      %585 = vmatpush1.bf16.msra.mxu0 %v566
      %586 = vmatprep.subr.bf16.mxu0 0
      %587 = vmatpush1.bf16.msra.mxu0 %v567
      %588 = vmatprep.subr.bf16.mxu0 0
      %589 = vmatpush1.bf16.msra.mxu0 %v568
      %590 = vmatprep.subr.bf16.mxu0 0
      %591 = vmatpush1.bf16.msra.mxu0 %v569
      %592 = vmatprep.subr.bf16.mxu0 0
      %593 = vmatpush1.bf16.msra.mxu0 %v570
      %594 = vmatprep.subr.bf16.mxu0 0
      %595 = vmatpush1.bf16.msra.mxu0 %v571
      %596 = vmatprep.subr.bf16.mxu0 0
      %597 = vmatpush1.bf16.msra.mxu0 0
      %598 = vmatprep.subr.bf16.mxu0 0
      %599 = vmatpush1.bf16.msra.mxu0 0
      %600 = vmatprep.subr.bf16.mxu0 0
      %601 = vmatpush1.bf16.msra.mxu0 0
      %602 = vmatprep.subr.bf16.mxu0 0
      %603 = vmatpush1.bf16.msra.mxu0 0
      %604 = vmatprep.subr.bf16.mxu0 0
      %605 = vmatpush1.bf16.msra.mxu0 0
      %606 = vmatprep.subr.bf16.mxu0 0
      %607 = vmatpush1.bf16.msra.mxu0 0
      %608 = vmatprep.subr.bf16.mxu0 0
      %609 = vmatpush1.bf16.msra.mxu0 0
      %610 = vmatprep.subr.bf16.mxu0 0
      %611 = vmatpush1.bf16.msra.mxu0 0
      %612 = vmatprep.mubr.bf16.mxu0 0
      %613 = vmatmul.mubr.bf16.gmra.mrb[0].mxu0 %v512
      %v614 = vpop.f32.mrb[0].mxu0
      %v615 = vadd.f32 0.0, %v614
      %v616 = vpop.f32.mrb[0].mxu0
      %v617 = vpop.f32.mrb[0].mxu0
      %v618 = vadd.f32 0.0, %v617
      %v619 = vpop.f32.mrb[0].mxu0
      %620 = vmatprep.mubr.bf16.mxu0 0
      %621 = vmatmul.mubr.bf16.gmra.mrb[0].mxu0 %v513
      %v622 = vpop.f32.mrb[0].mxu0
      %v623 = vadd.f32 0.0, %v622
      %v624 = vpop.f32.mrb[0].mxu0
      %v625 = vpop.f32.mrb[0].mxu0
      %v626 = vadd.f32 0.0, %v625
      %v627 = vpop.f32.mrb[0].mxu0
      %628 = vmatprep.mubr.bf16.mxu0 0
      %629 = vmatmul.mubr.bf16.gmra.mrb[0].mxu0 %v514
      %v630 = vpop.f32.mrb[0].mxu0
      %v631 = vadd.f32 0.0, %v630
      %v632 = vpop.f32.mrb[0].mxu0
      %v633 = vpop.f32.mrb[0].mxu0
      %v634 = vadd.f32 0.0, %v633
      %v635 = vpop.f32.mrb[0].mxu0
      %636 = vmatprep.mubr.bf16.mxu0 0
      %637 = vmatmul.mubr.bf16.gmra.mrb[0].mxu0 %v515
      %v638 = vpop.f32.mrb[0].mxu0
      %v639 = vadd.f32 0.0, %v638
      %v640 = vpop.f32.mrb[0].mxu0
      %v641 = vpop.f32.mrb[0].mxu0
      %v642 = vadd.f32 0.0, %v641
      %v643 = vpop.f32.mrb[0].mxu0
      %644 = vdwg.mxu0
      %645 = vst [vmem:[%s199] sm:$0xff] %v615
      %646 = vst [vmem:[%s199 + $0x8] sm:$0xff] %v618
      %647 = vst [vmem:[%s199 + $0x10] sm:$0xff] %v623
      %648 = vst [vmem:[%s199 + $0x18] sm:$0xff] %v626
      %649 = vst [vmem:[%s199 + $0x20] sm:$0xff] %v631
      %650 = vst [vmem:[%s199 + $0x28] sm:$0xff] %v634
      %651 = vst [vmem:[%s199 + $0x30] sm:$0xff] %v639
      %652 = vst [vmem:[%s199 + $0x38] sm:$0xff] %v642
      %s653 = smul.u32 8, %s15
      %p654 = scmp.lt.s32.totalorder %s653, 15
      %s655 = scalar_select %p654, %s653, 15
      %s656 = smul.addr %s655, 8
      %s657 = scalar_lea.vmem %s4, %s656
      // Predicated region
      $region37: #{neural_net_forward.1} parent=35 // pred_check
        %p658 = pneg %p122
      $region38: #{neural_net_forward.1} parent=35 // pred_check_branch
        %660 = sbr.rel (%p658) target = $region40
      $region39: #{neural_net_forward.1} parent=35 // pred_region
        %s661 = smul.u32 8, %s15
      $region40: #{neural_net_forward.1} parent=35 // pred_fallthru
        _
    $region36: #{neural_net_forward.1} parent=5 // pred_fallthru
      _
    %p662 = scmp.le.s32.totalorder 2, %s10
    // Predicated region
    $region41: #{neural_net_forward.1} parent=5 // pred_check
      %p663 = pneg %p662
    $region42: #{neural_net_forward.1} parent=5 // pred_check_branch
      %665 = sbr.rel (%p663) target = $region44
    $region43: #{neural_net_forward.1} parent=5 // pred_region
      %s666 = ssub.s32 %s10, 2
      // Predicated region
      $region45: #{neural_net_forward.1} parent=43 // pred_check
        %p667 = pneg %p128
      $region46: #{neural_net_forward.1} parent=43 // pred_check_branch
        %669 = sbr.rel (%p667) target = $region48
      $region47: #{neural_net_forward.1} parent=43 // pred_region
        %s670 = smul.u32 8, %s16
        %p671 = scmp.lt.s32.totalorder %s670, 15
        %s672 = scalar_select %p671, %s670, 15
        %s673 = smul.addr %s672, 8
        %s674 = scalar_lea.vmem %s4, %s673
      $region48: #{neural_net_forward.1} parent=43 // pred_fallthru
        _
    $region44: #{neural_net_forward.1} parent=5 // pred_fallthru
      _
  $region6: #{neural_net_forward.1} parent=0 // loop_footer
    %s14 = sadd.s32 1, %s10
  $region7: #{neural_net_forward.1} parent=0 // loop_footer_branch
    %9 = sbr.rel target = $region3
  $region8: #{neural_net_forward.1} parent=0 // loop_exit
    _

</llo_original>
